<compile_context>
chip_gen: v5e
topology: v5e:2x2
jax: 0.10.0
libtpu: 0.0.40
codegen_flags: <defaults>
</compile_context>

<pallas_src>
import jax
import jax.numpy as jnp
from jax.experimental import pallas as pl
from jax.experimental.pallas import tpu as pltpu


# ---------------------------------------------------------------------------
# Path 1: zero-HBM-traffic identity via output/input aliasing.
# ---------------------------------------------------------------------------
def _identity_alias_kernel(x_hbm, o_hbm, flag_smem):
    # Output aliases input (input_output_aliases={0: 0}), so there is nothing
    # to move.  The single SMEM scalar store below is a lowering-safety no-op
    # that keeps the kernel body non-empty; it costs one scalar cycle and
    # exactly zero HBM traffic.
    del x_hbm, o_hbm
    flag_smem[0] = jnp.int32(1)


def placeholder_forward(x):
    """Identity forward (PlaceHolder / nn.Identity): aliased, zero bytes moved."""
    x = jnp.asarray(x)

    # Degenerate cases: a kernel launch costs more than it could ever save.
    if x.ndim == 0 or x.size == 0:
        return x

    return pl.pallas_call(
        _identity_alias_kernel,
        out_shape=jax.ShapeDtypeStruct(x.shape, x.dtype),
        in_specs=[pl.BlockSpec(memory_space=pl.ANY)],   # raw HBM ref, no auto-DMA
        out_specs=pl.BlockSpec(memory_space=pl.ANY),    # same buffer as the input
        scratch_shapes=[pltpu.SMEM((1,), jnp.int32)],
        input_output_aliases={0: 0},                    # identity = alias, not copy
    )(x)


# ---------------------------------------------------------------------------
# Path 2: explicit fresh-buffer copy via raw HBM->HBM DMA.
# ---------------------------------------------------------------------------
def _make_copy_kernel(chunks):
    """Build a kernel copying static row-chunks of an (R, C) HBM array.

    `chunks` is a tuple of (row_start, row_size) Python ints, one per grid
    step.  Each grid step issues exactly one whole-chunk DMA (start + wait),
    so steps are self-contained and safe to shard across TensorCores.
    """

    def kernel(x_hbm, o_hbm, sem):
        if len(chunks) == 1:
            start, size = chunks[0]
            cp = pltpu.make_async_copy(
                x_hbm.at[pl.ds(start, size), :],
                o_hbm.at[pl.ds(start, size), :],
                sem,
            )
            cp.start()
            cp.wait()
        else:
            i = pl.program_id(0)
            for step, (start, size) in enumerate(chunks):

                @pl.when(i == step)
                def _copy(start=start, size=size):
                    cp = pltpu.make_async_copy(
                        x_hbm.at[pl.ds(start, size), :],
                        o_hbm.at[pl.ds(start, size), :],
                        sem,
                    )
                    cp.start()
                    cp.wait()

    return kernel


def placeholder_copy_forward(x, *, min_split_bytes=4 * 1024 * 1024):
    """Identity that materializes a new buffer with a roofline HBM->HBM copy."""
    x = jnp.asarray(x)

    if x.ndim == 0 or x.size == 0:
        return x

    orig_shape = x.shape
    C = orig_shape[-1]
    R = x.size // C
    x2d = x.reshape(R, C)  # free for contiguous inputs

    itemsize = jnp.dtype(x.dtype).itemsize
    total_bytes = x.size * itemsize

    # At most two balanced row chunks: one DMA per v7x TensorCore for large
    # tensors (wall clock = max per-core bytes, so keep them ~equal and merge
    # the remainder).  Otherwise a single whole-array DMA — on single-TC
    # v5e/v6e chunking is pure overhead since nothing is staged in VMEM.
    if R >= 2 and total_bytes >= min_split_bytes:
        half = (R + 1) // 2
        chunks = ((0, half), (half, R - half))
    else:
        chunks = ((0, R),)

    out2d = pl.pallas_call(
        _make_copy_kernel(chunks),
        out_shape=jax.ShapeDtypeStruct((R, C), x.dtype),
        grid=(len(chunks),),
        in_specs=[pl.BlockSpec(memory_space=pl.ANY)],   # raw HBM ref, no auto-DMA
        out_specs=pl.BlockSpec(memory_space=pl.ANY),    # raw HBM ref, no auto-DMA
        scratch_shapes=[pltpu.SemaphoreType.DMA],
        compiler_params=pltpu.CompilerParams(
            dimension_semantics=("parallel",),          # v7x: one chunk per TC
        ),
    )(x2d)

    return out2d.reshape(orig_shape)


if __name__ == "__main__":
    key = jax.random.PRNGKey(0)
    k1, k2 = jax.random.split(key)

    # NCHW-style input consistent with typical zcls usage: batch=2, C=4, H=W=16.
    x = jax.random.normal(k1, (2, 4, 16, 16), dtype=jnp.float32)

    # Default (zero-copy alias) path.
    y = jax.block_until_ready(placeholder_forward(x))
    assert y.shape == x.shape, (y.shape, x.shape)
    assert y.dtype == x.dtype, (y.dtype, x.dtype)
    assert bool(jnp.array_equal(y, x)), "identity mismatch (alias path)"

    # Explicit copy path, single whole-array DMA (grid=(1,)).
    y1 = jax.block_until_ready(placeholder_copy_forward(x))
    assert y1.shape == x.shape and y1.dtype == x.dtype
    assert bool(jnp.array_equal(y1, x)), "identity mismatch (single-DMA copy)"

    # Odd, non-(8,128)-aligned bf16 shape, forcing the two-chunk balanced
    # split to exercise the multi-TensorCore copy path.
    x2 = jax.random.normal(k2, (5, 3, 17), dtype=jnp.bfloat16)
    y2 = jax.block_until_ready(placeholder_copy_forward(x2, min_split_bytes=64))
    assert y2.shape == x2.shape, (y2.shape, x2.shape)
    assert y2.dtype == x2.dtype, (y2.dtype, x2.dtype)
    assert bool(jnp.array_equal(y2, x2)), "identity mismatch (balanced 2-chunk copy)"

    print("KERNEL_OK")
</pallas_src>

<mosaic_0001>
module attributes {stable_mosaic.version = 11 : i64} {
  func.func @_identity_alias_kernel(%arg0: memref<2x4x16x16xf32, #tpu.memory_space<any>>, %arg1: memref<2x4x16x16xf32, #tpu.memory_space<any>>, %arg2: memref<1xi32, #tpu.memory_space<smem>>) attributes {dimension_semantics = [], scalar_prefetch = 0 : i64, scratch_operands = 1 : i64, tpu.core_type = #tpu.core_type<tc>} {
    %c1_i32 = arith.constant 1 : i32
    %c0 = arith.constant 0 : index
    %0 = memref.load %arg2[%c0] : memref<1xi32, #tpu.memory_space<smem>>
    memref.store %c1_i32, %arg2[%c0] : memref<1xi32, #tpu.memory_space<smem>>
    return
  }
}

</mosaic_0001>

<llo_original>
// kernel: tpu_custom_call.1
$region0: #{tpu_custom_call.1}
  #allocation0 [shape = 'u32[]', space=smem, size = 0x4, offset = 0x4, fixed_abs, tag = 'smem constant byte address 0x4 - core index']
  #allocation1 [shape = 'u32[72,128]{1,0:T(1,128)}', space=vmem, size = 0x9000, scoped, tag = 'internal scratch']
  #allocation2 [shape = 's32[1]{0:T(128)}', space=smem, size = 0x200, scoped, tag = 'scratch operand']
  %s0 = inlined_call_operand.hbm [shape: f32[2,4,16,16], index: 0, kind: input, shape index: {}, may-alias: {0,1}]
  %s1 = inlined_call_operand.hbm [shape: f32[2,4,16,16], index: 1, kind: output, shape index: {}, may-alias: {0,1}]
  %s2 = sld [smem:[#allocation0]]
  $region2: #{tpu_custom_call.1} parent=0
    _
  %s4 = ssub.s32 1, %s2
  %s5 = scalar_select 0, %s4, %s2
  %s6 = scalar_lea.smem [#allocation2], 0
  %7 = sst [smem:[%s6]] 1

</llo_original>
